<compile_context>
chip_gen: v6e
topology: v6e:2x2x1
jax: 0.10.0
libtpu: 0.0.40
codegen_flags: <defaults>
</compile_context>

<pallas_src>
import functools

import jax
import jax.numpy as jnp
from jax.experimental import pallas as pl
from jax.experimental.pallas import tpu as pltpu

EPS = 1e-6


def _final_layer_kernel(coef_ref, w0_ref, b0_ref, xg_ref, tx_ref, hg_ref,
                        out_ref, *, nbasis, nchan):
    # coef_ref : (K, C)   SMEM   -0.5 / (exp(sigma) + eps)^2
    # w0_ref   : (1, K)   SMEM   row 0 of the Linear weight
    # b0_ref   : (1, 1)   SMEM   bias[0]
    # xg_ref   : (1, G, C)       grid locations          (G on sublanes)
    # tx_ref   : (1, C, Tt)      target locations^T      (Tt lane-dense)
    # hg_ref   : (1, G, K*C)     grid function values    (G on sublanes)
    # out_ref  : (1, C, Tt)      output^T                (Tt lane-dense)
    xg = xg_ref[0]                       # (G, C)
    tx = tx_ref[0]                       # (C, Tt)
    hg = hg_ref[0]                       # (G, K*C)
    b0 = b0_ref[0, 0]

    for c in range(nchan):               # tiny static loops: nchan*nbasis ~ 12
        xg_c = xg[:, c:c + 1]            # (G, 1)   broadcasts along lanes
        tx_c = tx[c:c + 1, :]            # (1, Tt)  broadcasts along sublanes
        diff = xg_c - tx_c               # (G, Tt)  lane-dense slab
        d2 = diff * diff                 # hoisted out of the k loop
        acc_slab = jnp.zeros(d2.shape, jnp.float32)
        for k in range(nbasis):
            # one VPU mul + one EUP exp per (k, c); constants folded into coef
            wt = jnp.exp(d2 * coef_ref[k, c])                  # (G, Tt)
            idx = k * nchan + c
            h_col = w0_ref[0, k] * hg[:, idx:idx + 1]          # (G, 1), scalar*col
            acc_slab = acc_slab + h_col * wt                   # (G, Tt)
        # single cross-sublane reduce per channel (XLU), instead of one per k
        contrib = jnp.sum(acc_slab, axis=0, keepdims=True)     # (1, Tt)
        out_ref[0, c:c + 1, :] = (contrib + b0).astype(out_ref.dtype)


def _pick_t_tile(t_pad, g):
    """Largest lane-friendly T tile dividing the padded T, capped by the vreg
    budget for the three live (G, Tt) f32 slabs: G * Tt * 4B * 3 <= ~160 KB."""
    budget_lanes = max(128, (160 * 1024) // (max(g, 1) * 4 * 3))
    for cand in (2048, 1024, 512, 256, 128):
        if cand <= budget_lanes and t_pad % cand == 0:
            return cand
    return 128  # t_pad is always a multiple of 128


def final_layer_forward(x_grid, h_grid, target_x, sigma, w, b):
    """x_grid (B,G,C), h_grid (B,G,K,C), target_x (B,T,C),
    sigma (K,C), w (O,K) [nn.Linear storage], b (O,).  Returns (B,T,C)."""
    B, G, C = x_grid.shape
    _, T, _ = target_x.shape
    _, _, K, _ = h_grid.shape

    # Pad T up to a multiple of 128 so the T grid axis always pipelines and
    # output stores are wide unmasked lane-dense vst; padded columns are
    # computed with dummy targets and sliced off below.
    T_pad = ((T + 127) // 128) * 128
    if T_pad != T:
        target_x = jnp.pad(target_x, ((0, 0), (0, T_pad - T), (0, 0)))

    # Wrapper-side layout plumbing (lane-dense targets/output, flat basis axis)
    # and tiny precomputed parameters destined for SMEM.
    tx_t = jnp.transpose(target_x, (0, 2, 1))           # (B, C, T_pad)
    hg_f = h_grid.reshape(B, G, K * C)                  # (B, G, K*C)
    inv_scales = 1.0 / (jnp.exp(sigma) + EPS)           # (K, C)
    coef = (-0.5) * inv_scales * inv_scales             # (K, C)  folded constant
    w0 = w[0].reshape(1, K)                             # only o=0 survives [..., 0]
    b0 = b[0].reshape(1, 1)

    t_tile = _pick_t_tile(T_pad, G)
    grid = (B, T_pad // t_tile)

    kernel = functools.partial(_final_layer_kernel, nbasis=K, nchan=C)

    grid_spec = pltpu.PrefetchScalarGridSpec(
        num_scalar_prefetch=0,
        grid=grid,
        in_specs=[
            pl.BlockSpec(memory_space=pltpu.MemorySpace.SMEM),           # coef
            pl.BlockSpec(memory_space=pltpu.MemorySpace.SMEM),           # w0
            pl.BlockSpec(memory_space=pltpu.MemorySpace.SMEM),           # b0
            pl.BlockSpec((1, G, C), lambda bi, ti: (bi, 0, 0)),          # x_grid
            pl.BlockSpec((1, C, t_tile), lambda bi, ti: (bi, 0, ti)),    # target_x^T
            pl.BlockSpec((1, G, K * C), lambda bi, ti: (bi, 0, 0)),      # h_grid (flat)
        ],
        out_specs=pl.BlockSpec((1, C, t_tile), lambda bi, ti: (bi, 0, ti)),
    )

    out_t = pl.pallas_call(
        kernel,
        out_shape=jax.ShapeDtypeStruct((B, C, T_pad), x_grid.dtype),
        grid_spec=grid_spec,
        compiler_params=pltpu.CompilerParams(
            dimension_semantics=("parallel", "parallel")),
    )(coef, w0, b0, x_grid, tx_t, hg_f)

    out = jnp.transpose(out_t, (0, 2, 1))               # (B, T_pad, C)
    return out[:, :T, :] if T_pad != T else out


def final_layer_reference(x_grid, h_grid, target_x, sigma, w, b):
    """Pure-JAX mirror of the PyTorch forward pass (for verification)."""
    scales = jnp.exp(sigma)                                            # (K, C)
    d = x_grid[:, :, None, :] - target_x[:, None, :, :]                # (B, G, T, C)
    d = d[:, :, :, None, :] / (scales[None, None, None, :, :] + EPS)   # (B, G, T, K, C)
    wt = jnp.exp(-0.5 * d ** 2)
    h = h_grid[:, :, None, :, :]                                       # (B, G, 1, K, C)
    h_out = jnp.sum(h * wt, axis=1)                                    # (B, T, K, C)
    h_out = jnp.swapaxes(h_out, -2, -1)                                # (B, T, C, K)
    y = jnp.einsum('btck,ok->btco', h_out, w) + b[None, None, None, :] # (B, T, C, O)
    return y[..., 0]                                                   # (B, T, C)


if __name__ == "__main__":
    B, G, T = 2, 16, 8          # batch, grid points, target points
    C, K, O = 4, 3, 2           # in_channels, nbasis, out_channels

    key = jax.random.PRNGKey(0)
    k1, k2, k3, k4, k5 = jax.random.split(key, 5)

    x_grid = jax.random.normal(k1, (B, G, C), dtype=jnp.float32)
    target_x = jax.random.normal(k2, (B, T, C), dtype=jnp.float32)
    h_grid = jax.random.normal(k3, (B, G, K, C), dtype=jnp.float32)

    # Parameters (deterministic init; mirrors the shapes in __init__):
    #   sigma = log(min_init_lengthscale + init_lengthscale * ones(nbasis, in_channels))
    init_lengthscale = 1.0
    min_init_lengthscale = 1e-6
    sigma = jnp.log(min_init_lengthscale
                    + init_lengthscale * jnp.ones((K, C), dtype=jnp.float32))
    # nn.Linear(nbasis, out_channels): weight (O, K), bias (O,)
    # TODO(synk): init_sequential_weights is not defined in the source file; using a
    #             deterministic small random init of the same shapes instead.
    w = 0.1 * jax.random.normal(k4, (O, K), dtype=jnp.float32)
    b = 0.1 * jax.random.normal(k5, (O,), dtype=jnp.float32)

    out = final_layer_forward(x_grid, h_grid, target_x, sigma, w, b)
    out = jax.block_until_ready(out)

    ref = final_layer_reference(x_grid, h_grid, target_x, sigma, w, b)
    assert out.shape == (B, T, C), out.shape
    assert jnp.allclose(out, ref, atol=1e-5, rtol=1e-5), "mismatch vs reference"

    print("KERNEL_OK")
</pallas_src>

<mosaic_0001>
module attributes {stable_mosaic.version = 11 : i64} {
  func.func @_final_layer_kernel(%arg0: i32, %arg1: i32, %arg2: memref<3x4xf32, #tpu.memory_space<smem>>, %arg3: memref<1x3xf32, #tpu.memory_space<smem>>, %arg4: memref<1x1xf32, #tpu.memory_space<smem>>, %arg5: memref<1x16x4xf32, #tpu.memory_space<vmem>>, %arg6: memref<1x4x128xf32, #tpu.memory_space<vmem>>, %arg7: memref<1x16x12xf32, #tpu.memory_space<vmem>>, %arg8: memref<1x4x128xf32, #tpu.memory_space<vmem>>) attributes {dimension_semantics = [#tpu.dimension_semantics<parallel>, #tpu.dimension_semantics<parallel>], iteration_bounds = array<i64: 2, 1>, scalar_prefetch = 0 : i64, scratch_operands = 0 : i64, tpu.core_type = #tpu.core_type<tc>, window_params = [{transform_indices = @transform_0, window_bounds = array<i64: 3, 4>}, {transform_indices = @transform_1, window_bounds = array<i64: 1, 3>}, {transform_indices = @transform_2, window_bounds = array<i64: 1, 1>}, {transform_indices = @transform_3, window_bounds = array<i64: 1, 16, 4>}, {transform_indices = @transform_4, window_bounds = array<i64: 1, 4, 128>}, {transform_indices = @transform_5, window_bounds = array<i64: 1, 16, 12>}, {transform_indices = @transform_6, window_bounds = array<i64: 1, 4, 128>}]} {
    %c0 = arith.constant 0 : index
    %c0_0 = arith.constant 0 : index
    %c0_1 = arith.constant 0 : index
    %0 = vector.load %arg5[%c0, %c0_0, %c0_1] : memref<1x16x4xf32, #tpu.memory_space<vmem>>, vector<1x16x4xf32>
    %1 = vector.shape_cast %0 : vector<1x16x4xf32> to vector<16x4xf32>
    %c0_2 = arith.constant 0 : index
    %c0_3 = arith.constant 0 : index
    %c0_4 = arith.constant 0 : index
    %2 = vector.load %arg6[%c0_2, %c0_3, %c0_4] : memref<1x4x128xf32, #tpu.memory_space<vmem>>, vector<1x4x128xf32>
    %3 = vector.shape_cast %2 : vector<1x4x128xf32> to vector<4x128xf32>
    %c0_5 = arith.constant 0 : index
    %c0_6 = arith.constant 0 : index
    %c0_7 = arith.constant 0 : index
    %4 = vector.load %arg7[%c0_5, %c0_6, %c0_7] : memref<1x16x12xf32, #tpu.memory_space<vmem>>, vector<1x16x12xf32>
    %5 = vector.shape_cast %4 : vector<1x16x12xf32> to vector<16x12xf32>
    %c0_8 = arith.constant 0 : index
    %c0_9 = arith.constant 0 : index
    %6 = memref.load %arg4[%c0_8, %c0_9] : memref<1x1xf32, #tpu.memory_space<smem>>
    %7 = vector.extract_strided_slice %1 {offsets = [0, 0], sizes = [16, 1], strides = [1, 1]} : vector<16x4xf32> to vector<16x1xf32>
    %8 = vector.extract_strided_slice %3 {offsets = [0, 0], sizes = [1, 128], strides = [1, 1]} : vector<4x128xf32> to vector<1x128xf32>
    %9 = vector.broadcast %7 : vector<16x1xf32> to vector<16x128xf32>
    %10 = vector.broadcast %8 : vector<1x128xf32> to vector<16x128xf32>
    %11 = arith.subf %9, %10 : vector<16x128xf32>
    %12 = arith.mulf %11, %11 : vector<16x128xf32>
    %cst = arith.constant 0.000000e+00 : f32
    %13 = vector.broadcast %cst : f32 to vector<16x128xf32>
    %c0_10 = arith.constant 0 : index
    %c0_11 = arith.constant 0 : index
    %14 = memref.load %arg2[%c0_10, %c0_11] : memref<3x4xf32, #tpu.memory_space<smem>>
    %15 = vector.broadcast %14 : f32 to vector<16x128xf32>
    %16 = arith.mulf %12, %15 : vector<16x128xf32>
    %17 = math.exp %16 : vector<16x128xf32>
    %c0_12 = arith.constant 0 : index
    %c0_13 = arith.constant 0 : index
    %18 = memref.load %arg3[%c0_12, %c0_13] : memref<1x3xf32, #tpu.memory_space<smem>>
    %19 = vector.extract_strided_slice %5 {offsets = [0, 0], sizes = [16, 1], strides = [1, 1]} : vector<16x12xf32> to vector<16x1xf32>
    %20 = vector.broadcast %18 : f32 to vector<16x1xf32>
    %21 = arith.mulf %20, %19 : vector<16x1xf32>
    %22 = vector.broadcast %21 : vector<16x1xf32> to vector<16x128xf32>
    %23 = arith.mulf %22, %17 : vector<16x128xf32>
    %24 = arith.addf %13, %23 : vector<16x128xf32>
    %c1 = arith.constant 1 : index
    %c0_14 = arith.constant 0 : index
    %25 = memref.load %arg2[%c1, %c0_14] : memref<3x4xf32, #tpu.memory_space<smem>>
    %26 = vector.broadcast %25 : f32 to vector<16x128xf32>
    %27 = arith.mulf %12, %26 : vector<16x128xf32>
    %28 = math.exp %27 : vector<16x128xf32>
    %c0_15 = arith.constant 0 : index
    %c1_16 = arith.constant 1 : index
    %29 = memref.load %arg3[%c0_15, %c1_16] : memref<1x3xf32, #tpu.memory_space<smem>>
    %30 = vector.extract_strided_slice %5 {offsets = [0, 4], sizes = [16, 1], strides = [1, 1]} : vector<16x12xf32> to vector<16x1xf32>
    %31 = vector.broadcast %29 : f32 to vector<16x1xf32>
    %32 = arith.mulf %31, %30 : vector<16x1xf32>
    %33 = vector.broadcast %32 : vector<16x1xf32> to vector<16x128xf32>
    %34 = arith.mulf %33, %28 : vector<16x128xf32>
    %35 = arith.addf %24, %34 : vector<16x128xf32>
    %c2 = arith.constant 2 : index
    %c0_17 = arith.constant 0 : index
    %36 = memref.load %arg2[%c2, %c0_17] : memref<3x4xf32, #tpu.memory_space<smem>>
    %37 = vector.broadcast %36 : f32 to vector<16x128xf32>
    %38 = arith.mulf %12, %37 : vector<16x128xf32>
    %39 = math.exp %38 : vector<16x128xf32>
    %c0_18 = arith.constant 0 : index
    %c2_19 = arith.constant 2 : index
    %40 = memref.load %arg3[%c0_18, %c2_19] : memref<1x3xf32, #tpu.memory_space<smem>>
    %41 = vector.extract_strided_slice %5 {offsets = [0, 8], sizes = [16, 1], strides = [1, 1]} : vector<16x12xf32> to vector<16x1xf32>
    %42 = vector.broadcast %40 : f32 to vector<16x1xf32>
    %43 = arith.mulf %42, %41 : vector<16x1xf32>
    %44 = vector.broadcast %43 : vector<16x1xf32> to vector<16x128xf32>
    %45 = arith.mulf %44, %39 : vector<16x128xf32>
    %46 = arith.addf %35, %45 : vector<16x128xf32>
    %cst_20 = arith.constant dense<0.000000e+00> : vector<128xf32>
    %47 = vector.multi_reduction <add>, %46, %cst_20 [0] : vector<16x128xf32> to vector<128xf32>
    %48 = vector.shape_cast %47 : vector<128xf32> to vector<1x128xf32>
    %49 = vector.broadcast %6 : f32 to vector<1x128xf32>
    %50 = arith.addf %48, %49 : vector<1x128xf32>
    %c0_21 = arith.constant 0 : index
    %c0_22 = arith.constant 0 : index
    %c0_23 = arith.constant 0 : index
    %51 = vector.load %arg8[%c0_21, %c0_22, %c0_23] : memref<1x4x128xf32, #tpu.memory_space<vmem>>, vector<1x1x128xf32>
    %52 = vector.shape_cast %51 : vector<1x1x128xf32> to vector<1x128xf32>
    %53 = vector.shape_cast %50 : vector<1x128xf32> to vector<1x1x128xf32>
    tpu.vector_store %arg8[%c0_21, %c0_22, %c0_23], %53 {strides = array<i32>} : memref<1x4x128xf32, #tpu.memory_space<vmem>>, vector<1x1x128xf32>,
    %54 = vector.extract_strided_slice %1 {offsets = [0, 1], sizes = [16, 1], strides = [1, 1]} : vector<16x4xf32> to vector<16x1xf32>
    %55 = vector.extract_strided_slice %3 {offsets = [1, 0], sizes = [1, 128], strides = [1, 1]} : vector<4x128xf32> to vector<1x128xf32>
    %56 = vector.broadcast %54 : vector<16x1xf32> to vector<16x128xf32>
    %57 = vector.broadcast %55 : vector<1x128xf32> to vector<16x128xf32>
    %58 = arith.subf %56, %57 : vector<16x128xf32>
    %59 = arith.mulf %58, %58 : vector<16x128xf32>
    %cst_24 = arith.constant 0.000000e+00 : f32
    %60 = vector.broadcast %cst_24 : f32 to vector<16x128xf32>
    %c0_25 = arith.constant 0 : index
    %c1_26 = arith.constant 1 : index
    %61 = memref.load %arg2[%c0_25, %c1_26] : memref<3x4xf32, #tpu.memory_space<smem>>
    %62 = vector.broadcast %61 : f32 to vector<16x128xf32>
    %63 = arith.mulf %59, %62 : vector<16x128xf32>
    %64 = math.exp %63 : vector<16x128xf32>
    %c0_27 = arith.constant 0 : index
    %c0_28 = arith.constant 0 : index
    %65 = memref.load %arg3[%c0_27, %c0_28] : memref<1x3xf32, #tpu.memory_space<smem>>
    %66 = vector.extract_strided_slice %5 {offsets = [0, 1], sizes = [16, 1], strides = [1, 1]} : vector<16x12xf32> to vector<16x1xf32>
    %67 = vector.broadcast %65 : f32 to vector<16x1xf32>
    %68 = arith.mulf %67, %66 : vector<16x1xf32>
    %69 = vector.broadcast %68 : vector<16x1xf32> to vector<16x128xf32>
    %70 = arith.mulf %69, %64 : vector<16x128xf32>
    %71 = arith.addf %60, %70 : vector<16x128xf32>
    %c1_29 = arith.constant 1 : index
    %c1_30 = arith.constant 1 : index
    %72 = memref.load %arg2[%c1_29, %c1_30] : memref<3x4xf32, #tpu.memory_space<smem>>
    %73 = vector.broadcast %72 : f32 to vector<16x128xf32>
    %74 = arith.mulf %59, %73 : vector<16x128xf32>
    %75 = math.exp %74 : vector<16x128xf32>
    %c0_31 = arith.constant 0 : index
    %c1_32 = arith.constant 1 : index
    %76 = memref.load %arg3[%c0_31, %c1_32] : memref<1x3xf32, #tpu.memory_space<smem>>
    %77 = vector.extract_strided_slice %5 {offsets = [0, 5], sizes = [16, 1], strides = [1, 1]} : vector<16x12xf32> to vector<16x1xf32>
    %78 = vector.broadcast %76 : f32 to vector<16x1xf32>
    %79 = arith.mulf %78, %77 : vector<16x1xf32>
    %80 = vector.broadcast %79 : vector<16x1xf32> to vector<16x128xf32>
    %81 = arith.mulf %80, %75 : vector<16x128xf32>
    %82 = arith.addf %71, %81 : vector<16x128xf32>
    %c2_33 = arith.constant 2 : index
    %c1_34 = arith.constant 1 : index
    %83 = memref.load %arg2[%c2_33, %c1_34] : memref<3x4xf32, #tpu.memory_space<smem>>
    %84 = vector.broadcast %83 : f32 to vector<16x128xf32>
    %85 = arith.mulf %59, %84 : vector<16x128xf32>
    %86 = math.exp %85 : vector<16x128xf32>
    %c0_35 = arith.constant 0 : index
    %c2_36 = arith.constant 2 : index
    %87 = memref.load %arg3[%c0_35, %c2_36] : memref<1x3xf32, #tpu.memory_space<smem>>
    %88 = vector.extract_strided_slice %5 {offsets = [0, 9], sizes = [16, 1], strides = [1, 1]} : vector<16x12xf32> to vector<16x1xf32>
    %89 = vector.broadcast %87 : f32 to vector<16x1xf32>
    %90 = arith.mulf %89, %88 : vector<16x1xf32>
    %91 = vector.broadcast %90 : vector<16x1xf32> to vector<16x128xf32>
    %92 = arith.mulf %91, %86 : vector<16x128xf32>
    %93 = arith.addf %82, %92 : vector<16x128xf32>
    %cst_37 = arith.constant dense<0.000000e+00> : vector<128xf32>
    %94 = vector.multi_reduction <add>, %93, %cst_37 [0] : vector<16x128xf32> to vector<128xf32>
    %95 = vector.shape_cast %94 : vector<128xf32> to vector<1x128xf32>
    %96 = vector.broadcast %6 : f32 to vector<1x128xf32>
    %97 = arith.addf %95, %96 : vector<1x128xf32>
    %c0_38 = arith.constant 0 : index
    %c1_39 = arith.constant 1 : index
    %c0_40 = arith.constant 0 : index
    %98 = vector.load %arg8[%c0_38, %c1_39, %c0_40] : memref<1x4x128xf32, #tpu.memory_space<vmem>>, vector<1x1x128xf32>
    %99 = vector.shape_cast %98 : vector<1x1x128xf32> to vector<1x128xf32>
    %100 = vector.shape_cast %97 : vector<1x128xf32> to vector<1x1x128xf32>
    tpu.vector_store %arg8[%c0_38, %c1_39, %c0_40], %100 {strides = array<i32>} : memref<1x4x128xf32, #tpu.memory_space<vmem>>, vector<1x1x128xf32>,
    %101 = vector.extract_strided_slice %1 {offsets = [0, 2], sizes = [16, 1], strides = [1, 1]} : vector<16x4xf32> to vector<16x1xf32>
    %102 = vector.extract_strided_slice %3 {offsets = [2, 0], sizes = [1, 128], strides = [1, 1]} : vector<4x128xf32> to vector<1x128xf32>
    %103 = vector.broadcast %101 : vector<16x1xf32> to vector<16x128xf32>
    %104 = vector.broadcast %102 : vector<1x128xf32> to vector<16x128xf32>
    %105 = arith.subf %103, %104 : vector<16x128xf32>
    %106 = arith.mulf %105, %105 : vector<16x128xf32>
    %cst_41 = arith.constant 0.000000e+00 : f32
    %107 = vector.broadcast %cst_41 : f32 to vector<16x128xf32>
    %c0_42 = arith.constant 0 : index
    %c2_43 = arith.constant 2 : index
    %108 = memref.load %arg2[%c0_42, %c2_43] : memref<3x4xf32, #tpu.memory_space<smem>>
    %109 = vector.broadcast %108 : f32 to vector<16x128xf32>
    %110 = arith.mulf %106, %109 : vector<16x128xf32>
    %111 = math.exp %110 : vector<16x128xf32>
    %c0_44 = arith.constant 0 : index
    %c0_45 = arith.constant 0 : index
    %112 = memref.load %arg3[%c0_44, %c0_45] : memref<1x3xf32, #tpu.memory_space<smem>>
    %113 = vector.extract_strided_slice %5 {offsets = [0, 2], sizes = [16, 1], strides = [1, 1]} : vector<16x12xf32> to vector<16x1xf32>
    %114 = vector.broadcast %112 : f32 to vector<16x1xf32>
    %115 = arith.mulf %114, %113 : vector<16x1xf32>
    %116 = vector.broadcast %115 : vector<16x1xf32> to vector<16x128xf32>
    %117 = arith.mulf %116, %111 : vector<16x128xf32>
    %118 = arith.addf %107, %117 : vector<16x128xf32>
    %c1_46 = arith.constant 1 : index
    %c2_47 = arith.constant 2 : index
    %119 = memref.load %arg2[%c1_46, %c2_47] : memref<3x4xf32, #tpu.memory_space<smem>>
    %120 = vector.broadcast %119 : f32 to vector<16x128xf32>
    %121 = arith.mulf %106, %120 : vector<16x128xf32>
    %122 = math.exp %121 : vector<16x128xf32>
    %c0_48 = arith.constant 0 : index
    %c1_49 = arith.constant 1 : index
    %123 = memref.load %arg3[%c0_48, %c1_49] : memref<1x3xf32, #tpu.memory_space<smem>>
    %124 = vector.extract_strided_slice %5 {offsets = [0, 6], sizes = [16, 1], strides = [1, 1]} : vector<16x12xf32> to vector<16x1xf32>
    %125 = vector.broadcast %123 : f32 to vector<16x1xf32>
    %126 = arith.mulf %125, %124 : vector<16x1xf32>
    %127 = vector.broadcast %126 : vector<16x1xf32> to vector<16x128xf32>
    %128 = arith.mulf %127, %122 : vector<16x128xf32>
    %129 = arith.addf %118, %128 : vector<16x128xf32>
    %c2_50 = arith.constant 2 : index
    %c2_51 = arith.constant 2 : index
    %130 = memref.load %arg2[%c2_50, %c2_51] : memref<3x4xf32, #tpu.memory_space<smem>>
    %131 = vector.broadcast %130 : f32 to vector<16x128xf32>
    %132 = arith.mulf %106, %131 : vector<16x128xf32>
    %133 = math.exp %132 : vector<16x128xf32>
    %c0_52 = arith.constant 0 : index
    %c2_53 = arith.constant 2 : index
    %134 = memref.load %arg3[%c0_52, %c2_53] : memref<1x3xf32, #tpu.memory_space<smem>>
    %135 = vector.extract_strided_slice %5 {offsets = [0, 10], sizes = [16, 1], strides = [1, 1]} : vector<16x12xf32> to vector<16x1xf32>
    %136 = vector.broadcast %134 : f32 to vector<16x1xf32>
    %137 = arith.mulf %136, %135 : vector<16x1xf32>
    %138 = vector.broadcast %137 : vector<16x1xf32> to vector<16x128xf32>
    %139 = arith.mulf %138, %133 : vector<16x128xf32>
    %140 = arith.addf %129, %139 : vector<16x128xf32>
    %cst_54 = arith.constant dense<0.000000e+00> : vector<128xf32>
    %141 = vector.multi_reduction <add>, %140, %cst_54 [0] : vector<16x128xf32> to vector<128xf32>
    %142 = vector.shape_cast %141 : vector<128xf32> to vector<1x128xf32>
    %143 = vector.broadcast %6 : f32 to vector<1x128xf32>
    %144 = arith.addf %142, %143 : vector<1x128xf32>
    %c0_55 = arith.constant 0 : index
    %c2_56 = arith.constant 2 : index
    %c0_57 = arith.constant 0 : index
    %145 = vector.load %arg8[%c0_55, %c2_56, %c0_57] : memref<1x4x128xf32, #tpu.memory_space<vmem>>, vector<1x1x128xf32>
    %146 = vector.shape_cast %145 : vector<1x1x128xf32> to vector<1x128xf32>
    %147 = vector.shape_cast %144 : vector<1x128xf32> to vector<1x1x128xf32>
    tpu.vector_store %arg8[%c0_55, %c2_56, %c0_57], %147 {strides = array<i32>} : memref<1x4x128xf32, #tpu.memory_space<vmem>>, vector<1x1x128xf32>,
    %148 = vector.extract_strided_slice %1 {offsets = [0, 3], sizes = [16, 1], strides = [1, 1]} : vector<16x4xf32> to vector<16x1xf32>
    %149 = vector.extract_strided_slice %3 {offsets = [3, 0], sizes = [1, 128], strides = [1, 1]} : vector<4x128xf32> to vector<1x128xf32>
    %150 = vector.broadcast %148 : vector<16x1xf32> to vector<16x128xf32>
    %151 = vector.broadcast %149 : vector<1x128xf32> to vector<16x128xf32>
    %152 = arith.subf %150, %151 : vector<16x128xf32>
    %153 = arith.mulf %152, %152 : vector<16x128xf32>
    %cst_58 = arith.constant 0.000000e+00 : f32
    %154 = vector.broadcast %cst_58 : f32 to vector<16x128xf32>
    %c0_59 = arith.constant 0 : index
    %c3 = arith.constant 3 : index
    %155 = memref.load %arg2[%c0_59, %c3] : memref<3x4xf32, #tpu.memory_space<smem>>
    %156 = vector.broadcast %155 : f32 to vector<16x128xf32>
    %157 = arith.mulf %153, %156 : vector<16x128xf32>
    %158 = math.exp %157 : vector<16x128xf32>
    %c0_60 = arith.constant 0 : index
    %c0_61 = arith.constant 0 : index
    %159 = memref.load %arg3[%c0_60, %c0_61] : memref<1x3xf32, #tpu.memory_space<smem>>
    %160 = vector.extract_strided_slice %5 {offsets = [0, 3], sizes = [16, 1], strides = [1, 1]} : vector<16x12xf32> to vector<16x1xf32>
    %161 = vector.broadcast %159 : f32 to vector<16x1xf32>
    %162 = arith.mulf %161, %160 : vector<16x1xf32>
    %163 = vector.broadcast %162 : vector<16x1xf32> to vector<16x128xf32>
    %164 = arith.mulf %163, %158 : vector<16x128xf32>
    %165 = arith.addf %154, %164 : vector<16x128xf32>
    %c1_62 = arith.constant 1 : index
    %c3_63 = arith.constant 3 : index
    %166 = memref.load %arg2[%c1_62, %c3_63] : memref<3x4xf32, #tpu.memory_space<smem>>
    %167 = vector.broadcast %166 : f32 to vector<16x128xf32>
    %168 = arith.mulf %153, %167 : vector<16x128xf32>
    %169 = math.exp %168 : vector<16x128xf32>
    %c0_64 = arith.constant 0 : index
    %c1_65 = arith.constant 1 : index
    %170 = memref.load %arg3[%c0_64, %c1_65] : memref<1x3xf32, #tpu.memory_space<smem>>
    %171 = vector.extract_strided_slice %5 {offsets = [0, 7], sizes = [16, 1], strides = [1, 1]} : vector<16x12xf32> to vector<16x1xf32>
    %172 = vector.broadcast %170 : f32 to vector<16x1xf32>
    %173 = arith.mulf %172, %171 : vector<16x1xf32>
    %174 = vector.broadcast %173 : vector<16x1xf32> to vector<16x128xf32>
    %175 = arith.mulf %174, %169 : vector<16x128xf32>
    %176 = arith.addf %165, %175 : vector<16x128xf32>
    %c2_66 = arith.constant 2 : index
    %c3_67 = arith.constant 3 : index
    %177 = memref.load %arg2[%c2_66, %c3_67] : memref<3x4xf32, #tpu.memory_space<smem>>
    %178 = vector.broadcast %177 : f32 to vector<16x128xf32>
    %179 = arith.mulf %153, %178 : vector<16x128xf32>
    %180 = math.exp %179 : vector<16x128xf32>
    %c0_68 = arith.constant 0 : index
    %c2_69 = arith.constant 2 : index
    %181 = memref.load %arg3[%c0_68, %c2_69] : memref<1x3xf32, #tpu.memory_space<smem>>
    %182 = vector.extract_strided_slice %5 {offsets = [0, 11], sizes = [16, 1], strides = [1, 1]} : vector<16x12xf32> to vector<16x1xf32>
    %183 = vector.broadcast %181 : f32 to vector<16x1xf32>
    %184 = arith.mulf %183, %182 : vector<16x1xf32>
    %185 = vector.broadcast %184 : vector<16x1xf32> to vector<16x128xf32>
    %186 = arith.mulf %185, %180 : vector<16x128xf32>
    %187 = arith.addf %176, %186 : vector<16x128xf32>
    %cst_70 = arith.constant dense<0.000000e+00> : vector<128xf32>
    %188 = vector.multi_reduction <add>, %187, %cst_70 [0] : vector<16x128xf32> to vector<128xf32>
    %189 = vector.shape_cast %188 : vector<128xf32> to vector<1x128xf32>
    %190 = vector.broadcast %6 : f32 to vector<1x128xf32>
    %191 = arith.addf %189, %190 : vector<1x128xf32>
    %c0_71 = arith.constant 0 : index
    %c3_72 = arith.constant 3 : index
    %c0_73 = arith.constant 0 : index
    %192 = vector.load %arg8[%c0_71, %c3_72, %c0_73] : memref<1x4x128xf32, #tpu.memory_space<vmem>>, vector<1x1x128xf32>
    %193 = vector.shape_cast %192 : vector<1x1x128xf32> to vector<1x128xf32>
    %194 = vector.shape_cast %191 : vector<1x128xf32> to vector<1x1x128xf32>
    tpu.vector_store %arg8[%c0_71, %c3_72, %c0_73], %194 {strides = array<i32>} : memref<1x4x128xf32, #tpu.memory_space<vmem>>, vector<1x1x128xf32>,
    return
  }
  func.func @transform_0(%arg0: i32, %arg1: i32) -> (i32, i32) {
    %c0_i32 = arith.constant 0 : i32
    %c0_i32_0 = arith.constant 0 : i32
    %c0_i32_1 = arith.constant 0 : i32
    return %c0_i32, %c0_i32_0 : i32, i32
  }
  func.func @transform_1(%arg0: i32, %arg1: i32) -> (i32, i32) {
    %c0_i32 = arith.constant 0 : i32
    %c0_i32_0 = arith.constant 0 : i32
    %c0_i32_1 = arith.constant 0 : i32
    return %c0_i32, %c0_i32_0 : i32, i32
  }
  func.func @transform_2(%arg0: i32, %arg1: i32) -> (i32, i32) {
    %c0_i32 = arith.constant 0 : i32
    %c0_i32_0 = arith.constant 0 : i32
    %c0_i32_1 = arith.constant 0 : i32
    return %c0_i32, %c0_i32_0 : i32, i32
  }
  func.func @transform_3(%arg0: i32, %arg1: i32) -> (i32, i32, i32) {
    %c0_i32 = arith.constant 0 : i32
    %c0_i32_0 = arith.constant 0 : i32
    %c0_i32_1 = arith.constant 0 : i32
    return %arg0, %c0_i32, %c0_i32_0 : i32, i32, i32
  }
  func.func @transform_4(%arg0: i32, %arg1: i32) -> (i32, i32, i32) {
    %c0_i32 = arith.constant 0 : i32
    %c0_i32_0 = arith.constant 0 : i32
    return %arg0, %c0_i32, %arg1 : i32, i32, i32
  }
  func.func @transform_5(%arg0: i32, %arg1: i32) -> (i32, i32, i32) {
    %c0_i32 = arith.constant 0 : i32
    %c0_i32_0 = arith.constant 0 : i32
    %c0_i32_1 = arith.constant 0 : i32
    return %arg0, %c0_i32, %c0_i32_0 : i32, i32, i32
  }
  func.func @transform_6(%arg0: i32, %arg1: i32) -> (i32, i32, i32) {
    %c0_i32 = arith.constant 0 : i32
    %c0_i32_0 = arith.constant 0 : i32
    return %arg0, %c0_i32, %arg1 : i32, i32, i32
  }
}

</mosaic_0001>

<llo_original>
// kernel: tpu_custom_call.1
$region0: #{tpu_custom_call.1}
  #allocation0 [shape = 'u32[]', space=smem, size = 0x4, offset = 0x4, fixed_abs, tag = 'smem constant byte address 0x4 - core index']
  #allocation1 [shape = 'u32[144,128]{1,0:T(1,128)}', space=vmem, size = 0x12000, scoped, tag = 'internal scratch']
  #allocation2 [shape = 'f32[1,1]{1,0:T(1,128)S(6)}', space=smem, size = 0x200, scoped, tag = 'scoped memory for tpu_custom_call.1']
  %s0 = inlined_call_operand.vmem [shape: f32[3,4], index: 0, kind: input, shape index: {}]
  %s1 = inlined_call_operand.vmem [shape: f32[1,3], index: 1, kind: input, shape index: {}]
  %s2 = inlined_call_operand.<no memory space> [shape: f32[1,1], index: 2, kind: input, shape index: {}]
  %s3 = inlined_call_operand.vmem [shape: f32[2,16,4], index: 3, kind: input, shape index: {}]
  %s4 = inlined_call_operand.vmem [shape: f32[2,4,128], index: 4, kind: input, shape index: {}]
  %s5 = inlined_call_operand.vmem [shape: f32[2,16,12], index: 5, kind: input, shape index: {}]
  %s6 = inlined_call_operand.hbm [shape: f32[2,4,128], index: 6, kind: output, shape index: {}]
  %s7 = sld [smem:[#allocation0]]
  $region65: #{tpu_custom_call.1} parent=0
    _
  %s9 = ssub.s32 1, %s7
  %s10 = scalar_select 0, %s9, %s7
  %11 = sst [smem:[#allocation2]] %s2
  $region1: #{tpu_custom_call.1} parent=0
    #allocation3 [shape = 'u8[2048]{0}', space=smem, size = 0x800, scoped, tag = 'input window, operand 0, single buffered']
    #allocation4 [shape = 's32[2]{0}', space=sflag, size = 0x8, scoped, tag = 'scoped memory for tpu_custom_call.1']
    #allocation5 [shape = 's32[2]{0}', space=sflag, size = 0x8, scoped, tag = 'scoped memory for tpu_custom_call.1']
    #allocation6 [shape = 'u8[512]{0}', space=smem, size = 0x200, scoped, tag = 'input window, operand 1, single buffered']
    #allocation7 [shape = 's32[1]{0}', space=sflag, size = 0x4, scoped, tag = 'scoped memory for tpu_custom_call.1']
    #allocation8 [shape = 'u8[4096]{0}', space=vmem, size = 0x1000, scoped, tag = 'output window, operand 0']
    %12 = vsyncpa [#allocation5], 0
    %13 = vsyncpa [#allocation7], 0
    %14 = vsyncpa [#allocation4], 0
    %s15 = scalar_lea.sflag [#allocation4], 1
    %16 = vsyncpa %s15, 0
    loop: start=0, step=1, limit=4
    $region2: #{tpu_custom_call.1} parent=1 // loop_pre_header
      _
    $region3: #{tpu_custom_call.1} parent=1 // loop_header
      %s18 = sphi 0, %s22
      %p19 = scmp.ge.s32.totalorder %s18, 4
      %s25 = sphi 0, %s37
      %s26 = sphi 0, %s33
      %s27 = sphi 0, %s25
      %s28 = sphi 0, %s26
      %s29 = sphi 0, %s27
      %s30 = sphi 0, %s28
      %s38 = sphi 0, %s38
      %s40 = sphi 0, %s38
      %s41 = sphi 0, %s40
      %s55 = sphi 0, %s41
      %s59 = sphi 0, %s59
      %s61 = sphi 0, %s59
      %s62 = sphi 0, %s61
      %s76 = sphi 0, %s62
      %s80 = sphi 0, %s80
      %s82 = sphi 0, %s80
      %s83 = sphi 0, %s82
      %s97 = sphi 0, %s83
      %s103 = sphi 0, %s105
      %s106 = sphi 0, %s103
      %s107 = sphi 0, %s106
      %s123 = sphi 0, %s107
      %s131 = sphi 0, %s133
      %s134 = sphi 0, %s131
      %s135 = sphi 0, %s134
      %s151 = sphi 0, %s135
      %s157 = sphi 0, %s159
      %s160 = sphi 0, %s157
      %s161 = sphi 0, %s160
      %s177 = sphi 0, %s161
      %s185 = sphi 0, %s187
      %s188 = sphi 0, %s185
      %s189 = sphi 0, %s188
      %s205 = sphi 0, %s189
    $region4: #{tpu_custom_call.1} parent=1 // loop_header_branch
      %21 = sbr.rel (%p19) target = $region8
    $region5: #{tpu_custom_call.1} parent=1 // loop_body
      %s23 = ssub.s32 %s18, 1
      %s24 = ssub.s32 %s18, 2
      %s31 = sadd.s32 1, %s26
      %p32 = scmp.ge.s32.totalorder %s31, 1
      %s33 = scalar_select %p32, 0, %s31
      %s34 = sadd.s32 1, %s25
      %s35 = scalar_select %p32, %s34, %s25
      %p36 = scmp.ge.s32.totalorder %s35, 2
      %s37 = scalar_select %p36, 0, %s35
      %s39 = sadd.s32 %s38, 1
      %p42 = scmp.eq.s32.totalorder %s18, 1
      %p43 = scmp.ne.s32.totalorder %s38, %s40
      %p44 = scmp.eq.s32.totalorder %s18, 0
      %p45 = por %p43, %p44
      %p46 = scmp.ne.s32.totalorder %s38, %s40
      %p47 = scmp.eq.s32.totalorder %s23, 1
      %p48 = por %p46, %p47
      %p49 = scmp.ne.s32.totalorder %s40, %s41
      %p50 = scmp.eq.s32.totalorder %s23, 0
      %p51 = por %p49, %p50
      %p52 = scmp.ne.s32.totalorder %s40, %s41
      %p53 = scmp.eq.s32.totalorder %s24, 1
      %p54 = por %p52, %p53
      %p56 = scmp.ne.s32.totalorder %s41, %s55
      %p57 = scmp.eq.s32.totalorder %s24, 0
      %p58 = por %p56, %p57
      %s60 = sadd.s32 %s59, 1
      %p63 = scmp.eq.s32.totalorder %s18, 1
      %p64 = scmp.ne.s32.totalorder %s59, %s61
      %p65 = scmp.eq.s32.totalorder %s18, 0
      %p66 = por %p64, %p65
      %p67 = scmp.ne.s32.totalorder %s59, %s61
      %p68 = scmp.eq.s32.totalorder %s23, 1
      %p69 = por %p67, %p68
      %p70 = scmp.ne.s32.totalorder %s61, %s62
      %p71 = scmp.eq.s32.totalorder %s23, 0
      %p72 = por %p70, %p71
      %p73 = scmp.ne.s32.totalorder %s61, %s62
      %p74 = scmp.eq.s32.totalorder %s24, 1
      %p75 = por %p73, %p74
      %p77 = scmp.ne.s32.totalorder %s62, %s76
      %p78 = scmp.eq.s32.totalorder %s24, 0
      %p79 = por %p77, %p78
      %s81 = sadd.s32 %s80, 1
      %p84 = scmp.eq.s32.totalorder %s18, 1
      %p85 = scmp.ne.s32.totalorder %s80, %s82
      %p86 = scmp.eq.s32.totalorder %s18, 0
      %p87 = por %p85, %p86
      %p88 = scmp.ne.s32.totalorder %s80, %s82
      %p89 = scmp.eq.s32.totalorder %s23, 1
      %p90 = por %p88, %p89
      %p91 = scmp.ne.s32.totalorder %s82, %s83
      %p92 = scmp.eq.s32.totalorder %s23, 0
      %p93 = por %p91, %p92
      %p94 = scmp.ne.s32.totalorder %s82, %s83
      %p95 = scmp.eq.s32.totalorder %s24, 1
      %p96 = por %p94, %p95
      %p98 = scmp.ne.s32.totalorder %s83, %s97
      %p99 = scmp.eq.s32.totalorder %s24, 0
      %p100 = por %p98, %p99
      %s101 = ssub.s32 %s25, %s37
      %p102 = scmp.eq.s32.totalorder %s101, 0
      %s104 = sadd.s32 %s103, 1
      %s105 = scalar_select %p102, %s103, %s104
      %p108 = pneg %p102
      %p109 = scmp.eq.s32.totalorder %s18, 1
      %p110 = por %p108, %p109
      %p111 = scmp.ne.s32.totalorder %s103, %s106
      %p112 = scmp.eq.s32.totalorder %s18, 0
      %p113 = por %p111, %p112
      %p114 = scmp.ne.s32.totalorder %s103, %s106
      %p115 = scmp.eq.s32.totalorder %s23, 1
      %p116 = por %p114, %p115
      %p117 = scmp.ne.s32.totalorder %s106, %s107
      %p118 = scmp.eq.s32.totalorder %s23, 0
      %p119 = por %p117, %p118
      %p120 = scmp.ne.s32.totalorder %s106, %s107
      %p121 = scmp.eq.s32.totalorder %s24, 1
      %p122 = por %p120, %p121
      %p124 = scmp.ne.s32.totalorder %s107, %s123
      %p125 = scmp.eq.s32.totalorder %s24, 0
      %p126 = por %p124, %p125
      %s127 = ssub.s32 %s25, %s37
      %s128 = ssub.s32 %s26, %s33
      %s129 = sor.u32 %s127, %s128
      %p130 = scmp.eq.s32.totalorder %s129, 0
      %s132 = sadd.s32 %s131, 1
      %s133 = scalar_select %p130, %s131, %s132
      %p136 = pneg %p130
      %p137 = scmp.eq.s32.totalorder %s18, 1
      %p138 = por %p136, %p137
      %p139 = scmp.ne.s32.totalorder %s131, %s134
      %p140 = scmp.eq.s32.totalorder %s18, 0
      %p141 = por %p139, %p140
      %p142 = scmp.ne.s32.totalorder %s131, %s134
      %p143 = scmp.eq.s32.totalorder %s23, 1
      %p144 = por %p142, %p143
      %p145 = scmp.ne.s32.totalorder %s134, %s135
      %p146 = scmp.eq.s32.totalorder %s23, 0
      %p147 = por %p145, %p146
      %p148 = scmp.ne.s32.totalorder %s134, %s135
      %p149 = scmp.eq.s32.totalorder %s24, 1
      %p150 = por %p148, %p149
      %p152 = scmp.ne.s32.totalorder %s135, %s151
      %p153 = scmp.eq.s32.totalorder %s24, 0
      %p154 = por %p152, %p153
      %s155 = ssub.s32 %s25, %s37
      %p156 = scmp.eq.s32.totalorder %s155, 0
      %s158 = sadd.s32 %s157, 1
      %s159 = scalar_select %p156, %s157, %s158
      %p162 = pneg %p156
      %p163 = scmp.eq.s32.totalorder %s18, 1
      %p164 = por %p162, %p163
      %p165 = scmp.ne.s32.totalorder %s157, %s160
      %p166 = scmp.eq.s32.totalorder %s18, 0
      %p167 = por %p165, %p166
      %p168 = scmp.ne.s32.totalorder %s157, %s160
      %p169 = scmp.eq.s32.totalorder %s23, 1
      %p170 = por %p168, %p169
      %p171 = scmp.ne.s32.totalorder %s160, %s161
      %p172 = scmp.eq.s32.totalorder %s23, 0
      %p173 = por %p171, %p172
      %p174 = scmp.ne.s32.totalorder %s160, %s161
      %p175 = scmp.eq.s32.totalorder %s24, 1
      %p176 = por %p174, %p175
      %p178 = scmp.ne.s32.totalorder %s161, %s177
      %p179 = scmp.eq.s32.totalorder %s24, 0
      %p180 = por %p178, %p179
      %s181 = ssub.s32 %s25, %s37
      %s182 = ssub.s32 %s26, %s33
      %s183 = sor.u32 %s181, %s182
      %p184 = scmp.eq.s32.totalorder %s183, 0
      %s186 = sadd.s32 %s185, 1
      %s187 = scalar_select %p184, %s185, %s186
      %p190 = pneg %p184
      %p191 = scmp.eq.s32.totalorder %s18, 1
      %p192 = por %p190, %p191
      %p193 = scmp.ne.s32.totalorder %s185, %s188
      %p194 = scmp.eq.s32.totalorder %s18, 0
      %p195 = por %p193, %p194
      %p196 = scmp.ne.s32.totalorder %s185, %s188
      %p197 = scmp.eq.s32.totalorder %s23, 1
      %p198 = por %p196, %p197
      %p199 = scmp.ne.s32.totalorder %s188, %s189
      %p200 = scmp.eq.s32.totalorder %s23, 0
      %p201 = por %p199, %p200
      %p202 = scmp.ne.s32.totalorder %s188, %s189
      %p203 = scmp.eq.s32.totalorder %s24, 1
      %p204 = por %p202, %p203
      %p206 = scmp.ne.s32.totalorder %s189, %s205
      %p207 = scmp.eq.s32.totalorder %s24, 0
      %p208 = por %p206, %p207
      %p209 = scmp.le.s32.totalorder 1, %s18
      %p210 = scmp.lt.s32.totalorder %s18, 3
      %p211 = pnand %p209, %p210
      %p212 = pneg %p211
      // Predicated region
      $region9: #{tpu_custom_call.1} parent=5 // pred_check
        _
      $region10: #{tpu_custom_call.1} parent=5 // pred_check_branch
        %214 = sbr.rel (%p211) target = $region12
      $region11: #{tpu_custom_call.1} parent=5 // pred_region
        %s215 = ssub.s32 %s18, 1
        // Predicated region
        $region13: #{tpu_custom_call.1} parent=11 // pred_check
          %p216 = pneg %p51
        $region14: #{tpu_custom_call.1} parent=11 // pred_check_branch
          %218 = sbr.rel (%p216) target = $region16
        $region15: #{tpu_custom_call.1} parent=11 // pred_region
          %s220 = ssub.s32 64, 64
          %221 = vsyncadd [#allocation5], %s220
          %s223 = sshll.u32 %s0, 4
          %s224 = int_to_ptr.vmem [resolvable:$true] %s223
          %226 = dma.vmem_to_smem %s224, 64, [#allocation3], [#allocation5]
        $region16: #{tpu_custom_call.1} parent=11 // pred_fallthru
          _
        // Predicated region
        $region17: #{tpu_custom_call.1} parent=11 // pred_check
          %p227 = pneg %p72
        $region18: #{tpu_custom_call.1} parent=11 // pred_check_branch
          %229 = sbr.rel (%p227) target = $region20
        $region19: #{tpu_custom_call.1} parent=11 // pred_region
          %s231 = ssub.s32 16, 16
          %232 = vsyncadd [#allocation7], %s231
          %s234 = sshll.u32 %s1, 4
          %s235 = int_to_ptr.vmem [resolvable:$true] %s234
          %237 = dma.vmem_to_smem %s235, 16, [#allocation6], [#allocation7]
        $region20: #{tpu_custom_call.1} parent=11 // pred_fallthru
          _
        // Predicated region
        $region21: #{tpu_custom_call.1} parent=11 // pred_check
          %p238 = pneg %p93
        $region22: #{tpu_custom_call.1} parent=11 // pred_check_branch
          %240 = sbr.rel (%p238) target = $region24
        $region23: #{tpu_custom_call.1} parent=11 // pred_region
          _
        $region24: #{tpu_custom_call.1} parent=11 // pred_fallthru
          _
      $region12: #{tpu_custom_call.1} parent=5 // pred_fallthru
        _
      %p241 = scmp.lt.s32.totalorder %s18, 2
      // Predicated region
      $region25: #{tpu_custom_call.1} parent=5 // pred_check
        %p242 = pneg %p241
      $region26: #{tpu_custom_call.1} parent=5 // pred_check_branch
        %244 = sbr.rel (%p242) target = $region28
      $region27: #{tpu_custom_call.1} parent=5 // pred_region
        // Predicated region
        $region29: #{tpu_custom_call.1} parent=27 // pred_check
          %p245 = pneg %p113
        $region30: #{tpu_custom_call.1} parent=27 // pred_check_branch
          %247 = sbr.rel (%p245) target = $region32
        $region31: #{tpu_custom_call.1} parent=27 // pred_region
          %p248 = scmp.lt.s32.totalorder %s25, 1
          %s249 = scalar_select %p248, %s25, 1
          %s250 = smul.addr %s249, 2
          %s251 = smul.addr %s250, 8
          %s252 = scalar_lea.vmem %s3, %s251
        $region32: #{tpu_custom_call.1} parent=27 // pred_fallthru
          _
        // Predicated region
        $region33: #{tpu_custom_call.1} parent=27 // pred_check
          %p253 = pneg %p141
        $region34: #{tpu_custom_call.1} parent=27 // pred_check_branch
          %255 = sbr.rel (%p253) target = $region36
        $region35: #{tpu_custom_call.1} parent=27 // pred_region
          %p256 = scmp.lt.s32.totalorder %s25, 1
          %s257 = scalar_select %p256, %s25, 1
          %p258 = scmp.lt.s32.totalorder %s26, 0
          %s259 = scalar_select %p258, %s26, 0
          %s260 = sadd.s32 %s259, %s257
          %s261 = smul.addr %s260, 4
          %s262 = scalar_lea.vmem %s4, %s261
        $region36: #{tpu_custom_call.1} parent=27 // pred_fallthru
          _
        // Predicated region
        $region37: #{tpu_custom_call.1} parent=27 // pred_check
          %p263 = pneg %p167
        $region38: #{tpu_custom_call.1} parent=27 // pred_check_branch
          %265 = sbr.rel (%p263) target = $region40
        $region39: #{tpu_custom_call.1} parent=27 // pred_region
          %p266 = scmp.lt.s32.totalorder %s25, 1
          %s267 = scalar_select %p266, %s25, 1
          %s268 = smul.addr %s267, 2
          %s269 = smul.addr %s268, 8
          %s270 = scalar_lea.vmem %s5, %s269
        $region40: #{tpu_custom_call.1} parent=27 // pred_fallthru
          _
      $region28: #{tpu_custom_call.1} parent=5 // pred_fallthru
        _
      %p271 = scmp.le.s32.totalorder 1, %s18
      %p272 = scmp.lt.s32.totalorder %s18, 3
      %p273 = pnand %p271, %p272
      %p274 = pneg %p273
      // Predicated region
      $region41: #{tpu_custom_call.1} parent=5 // pred_check
        _
      $region42: #{tpu_custom_call.1} parent=5 // pred_check_branch
        %276 = sbr.rel (%p273) target = $region44
      $region43: #{tpu_custom_call.1} parent=5 // pred_region
        %s277 = ssub.s32 %s18, 1
        // Predicated region
        $region45: #{tpu_custom_call.1} parent=43 // pred_check
          %p278 = pneg %p51
        $region46: #{tpu_custom_call.1} parent=43 // pred_check_branch
          %280 = sbr.rel (%p278) target = $region48
        $region47: #{tpu_custom_call.1} parent=43 // pred_region
          %281 = dma.done [#allocation5], 64
        $region48: #{tpu_custom_call.1} parent=43 // pred_fallthru
          _
        // Predicated region
        $region49: #{tpu_custom_call.1} parent=43 // pred_check
          %p282 = pneg %p72
        $region50: #{tpu_custom_call.1} parent=43 // pred_check_branch
          %284 = sbr.rel (%p282) target = $region52
        $region51: #{tpu_custom_call.1} parent=43 // pred_region
          %285 = dma.done [#allocation7], 16
        $region52: #{tpu_custom_call.1} parent=43 // pred_fallthru
          _
        %286 = sfence
        %p287 = pneg %p51
        %p288 = pneg %p48
        %p289 = pneg %p72
        %p290 = pneg %p69
        %p291 = pneg %p93
        %p292 = pneg %p90
        %p293 = scmp.lt.s32.totalorder %s27, 1
        %s294 = scalar_select %p293, %s27, 1
        %s295 = smul.addr %s294, 2
        %s296 = smul.addr %s295, 8
        %s297 = scalar_lea.vmem %s3, %s296
        %p298 = pneg %p119
        %p299 = pneg %p116
        %p300 = scmp.lt.s32.totalorder %s27, 1
        %s301 = scalar_select %p300, %s27, 1
        %p302 = scmp.lt.s32.totalorder %s28, 0
        %s303 = scalar_select %p302, %s28, 0
        %s304 = sadd.s32 %s303, %s301
        %s305 = smul.addr %s304, 4
        %s306 = scalar_lea.vmem %s4, %s305
        %p307 = pneg %p147
        %p308 = pneg %p144
        %p309 = scmp.lt.s32.totalorder %s27, 1
        %s310 = scalar_select %p309, %s27, 1
        %s311 = smul.addr %s310, 2
        %s312 = smul.addr %s311, 8
        %s313 = scalar_lea.vmem %s5, %s312
        %p314 = pneg %p173
        %p315 = pneg %p170
        %p316 = pneg %p201
        %p317 = pneg %p198
        %s318 = sand.u32 %s188, 1
        %s319 = scalar_lea.sflag [#allocation4], %s318
        %s320 = sand.u32 %s188, 1
        %s321 = smul.addr %s320, 4
        %s322 = scalar_lea.vmem [#allocation8], %s321
        %p323 = scmp.lt.s32.totalorder %s27, 1
        %s324 = scalar_select %p323, %s27, 1
        %s325 = smul.addr %s324, 2
        %s326 = smul.addr %s325, 8
        %s327 = scalar_lea.vmem %s3, %s326
        %p328 = scmp.lt.s32.totalorder %s27, 1
        %s329 = scalar_select %p328, %s27, 1
        %p330 = scmp.lt.s32.totalorder %s28, 0
        %s331 = scalar_select %p330, %s28, 0
        %s332 = sadd.s32 %s331, %s329
        %s333 = smul.addr %s332, 4
        %s334 = scalar_lea.vmem %s4, %s333
        %p335 = scmp.lt.s32.totalorder %s27, 1
        %s336 = scalar_select %p335, %s27, 1
        %s337 = smul.addr %s336, 2
        %s338 = smul.addr %s337, 8
        %s339 = scalar_lea.vmem %s5, %s338
        %v340 = vld [vmem:[%s327] sm:$0xff]
        %v341 = vld [vmem:[%s327 + $0x8] sm:$0xff]
        %v342 = vld [vmem:[%s334] sm:$0xf]
        %v343 = vld [vmem:[%s339] sm:$0xff]
        %v344 = vld [vmem:[%s339 + $0x8] sm:$0xff]
        %s345 = sld [smem:[#allocation2]]
        %347 = vset.pattern.permute.xlu0 0
        %348 = vperm.xlu0 %347, %v340
        %v349 = vpop.permute.xlu0 %348
        %352 = vset.pattern.permute.xlu0 0
        %353 = vperm.xlu0 %352, %v341
        %v354 = vpop.permute.xlu0 %353
        %v356 = vlaneseq
        %v357 = vshrl.u32 %v356, 7
        %v358 = vsub.s32 0, %v357
        %v359 = vrot.slane %v342, %v358
        %v360 = vsub.f32 %v349, %v359
        %v361 = vsub.f32 %v354, %v359
        %v362 = vmul.f32 %v360, %v360
        %v363 = vmul.f32 %v361, %v361
        %s364 = sld [smem:[#allocation3]]
        %v365 = vstv %s364
        %v366 = vmul.f32 %v362, %v365
        %v367 = vmul.f32 %v363, %v365
        %v368 = vmul.f32 %v366, 1.442695
        %v369 = vpow.pop %v368
        %v370 = vmul.f32 %v367, 1.442695
        %v371 = vpow.pop %v370
        %s372 = sld [smem:[#allocation6]]
        %v373 = vstv %s372
        %v374 = vmul.f32 %v373, %v343
        %v375 = vmul.f32 %v373, %v344
        %377 = vset.pattern.permute.xlu0 0
        %378 = vperm.xlu0 %377, %v374
        %v379 = vpop.permute.xlu0 %378
        %382 = vset.pattern.permute.xlu0 0
        %383 = vperm.xlu0 %382, %v375
        %v384 = vpop.permute.xlu0 %383
        %v386 = vmul.f32 %v379, %v369
        %v387 = vmul.f32 %v384, %v371
        %v388 = vadd.f32 %v386, 0.0
        %v389 = vadd.f32 %v387, 0.0
        %s390 = sld [smem:[#allocation3 + $0x80]]
        %v391 = vstv %s390
        %v392 = vmul.f32 %v362, %v391
        %v393 = vmul.f32 %v363, %v391
        %v394 = vmul.f32 %v392, 1.442695
        %v395 = vpow.pop %v394
        %v396 = vmul.f32 %v393, 1.442695
        %v397 = vpow.pop %v396
        %s398 = sld [smem:[#allocation6 + $0x1]]
        %v399 = vstv %s398
        %v400 = vmul.f32 %v399, %v343
        %v401 = vmul.f32 %v399, %v344
        %403 = vset.pattern.permute.xlu0 4
        %404 = vperm.xlu0 %403, %v400
        %v405 = vpop.permute.xlu0 %404
        %408 = vset.pattern.permute.xlu0 4
        %409 = vperm.xlu0 %408, %v401
        %v410 = vpop.permute.xlu0 %409
        %v412 = vmul.f32 %v405, %v395
        %v413 = vmul.f32 %v410, %v397
        %v414 = vadd.f32 %v388, %v412
        %v415 = vadd.f32 %v389, %v413
        %s416 = sld [smem:[#allocation3 + $0x100]]
        %v417 = vstv %s416
        %v418 = vmul.f32 %v362, %v417
        %v419 = vmul.f32 %v363, %v417
        %v420 = vmul.f32 %v418, 1.442695
        %v421 = vpow.pop %v420
        %v422 = vmul.f32 %v419, 1.442695
        %v423 = vpow.pop %v422
        %s424 = sld [smem:[#allocation6 + $0x2]]
        %v425 = vstv %s424
        %v426 = vmul.f32 %v425, %v343
        %v427 = vmul.f32 %v425, %v344
        %429 = vset.pattern.permute.xlu0 8
        %430 = vperm.xlu0 %429, %v426
        %v431 = vpop.permute.xlu0 %430
        %434 = vset.pattern.permute.xlu0 8
        %435 = vperm.xlu0 %434, %v427
        %v436 = vpop.permute.xlu0 %435
        %v438 = vmul.f32 %v431, %v421
        %v439 = vmul.f32 %v436, %v423
        %v440 = vadd.f32 %v414, %v438
        %v441 = vadd.f32 %v415, %v439
        %v442 = vadd.f32 %v440, %v441
        %v443 = vrot.slane %v442, 4
        %v444 = vadd.f32 %v442, %v443
        %v445 = vrot.slane %v444, 2
        %v446 = vadd.f32 %v444, %v445
        %v447 = vrot.slane %v446, 1
        %v448 = vadd.f32 %v446, %v447
        %v449 = vstv %s345
        %v450 = vadd.f32 %v448, %v449
        %451 = vst [vmem:[%s322] sm:$0x1] %v450
        %452 = vset.pattern.permute.xlu0 1
        %453 = vperm.xlu0 %452, %v340
        %v454 = vpop.permute.xlu0 %453
        %456 = vset.pattern.permute.xlu0 1
        %457 = vperm.xlu0 %456, %v341
        %v458 = vpop.permute.xlu0 %457
        %v460 = vlaneseq
        %v461 = vshrl.u32 %v460, 7
        %v462 = vsub.s32 1, %v461
        %v463 = vrot.slane %v342, %v462
        %v464 = vsub.f32 %v454, %v463
        %v465 = vsub.f32 %v458, %v463
        %v466 = vmul.f32 %v464, %v464
        %v467 = vmul.f32 %v465, %v465
        %s468 = sld [smem:[#allocation3 + $0x1]]
        %v469 = vstv %s468
        %v470 = vmul.f32 %v466, %v469
        %v471 = vmul.f32 %v467, %v469
        %v472 = vmul.f32 %v470, 1.442695
        %v473 = vpow.pop %v472
        %v474 = vmul.f32 %v471, 1.442695
        %v475 = vpow.pop %v474
        %s476 = sld [smem:[#allocation6]]
        %v477 = vstv %s476
        %v478 = vmul.f32 %v477, %v343
        %v479 = vmul.f32 %v477, %v344
        %481 = vset.pattern.permute.xlu0 1
        %482 = vperm.xlu0 %481, %v478
        %v483 = vpop.permute.xlu0 %482
        %486 = vset.pattern.permute.xlu0 1
        %487 = vperm.xlu0 %486, %v479
        %v488 = vpop.permute.xlu0 %487
        %v490 = vmul.f32 %v483, %v473
        %v491 = vmul.f32 %v488, %v475
        %v492 = vadd.f32 %v490, 0.0
        %v493 = vadd.f32 %v491, 0.0
        %s494 = sld [smem:[#allocation3 + $0x81]]
        %v495 = vstv %s494
        %v496 = vmul.f32 %v466, %v495
        %v497 = vmul.f32 %v467, %v495
        %v498 = vmul.f32 %v496, 1.442695
        %v499 = vpow.pop %v498
        %v500 = vmul.f32 %v497, 1.442695
        %v501 = vpow.pop %v500
        %s502 = sld [smem:[#allocation6 + $0x1]]
        %v503 = vstv %s502
        %v504 = vmul.f32 %v503, %v343
        %v505 = vmul.f32 %v503, %v344
        %507 = vset.pattern.permute.xlu0 5
        %508 = vperm.xlu0 %507, %v504
        %v509 = vpop.permute.xlu0 %508
        %512 = vset.pattern.permute.xlu0 5
        %513 = vperm.xlu0 %512, %v505
        %v514 = vpop.permute.xlu0 %513
        %v516 = vmul.f32 %v509, %v499
        %v517 = vmul.f32 %v514, %v501
        %v518 = vadd.f32 %v492, %v516
        %v519 = vadd.f32 %v493, %v517
        %s520 = sld [smem:[#allocation3 + $0x101]]
        %v521 = vstv %s520
        %v522 = vmul.f32 %v466, %v521
        %v523 = vmul.f32 %v467, %v521
        %v524 = vmul.f32 %v522, 1.442695
        %v525 = vpow.pop %v524
        %v526 = vmul.f32 %v523, 1.442695
        %v527 = vpow.pop %v526
        %s528 = sld [smem:[#allocation6 + $0x2]]
        %v529 = vstv %s528
        %v530 = vmul.f32 %v529, %v343
        %v531 = vmul.f32 %v529, %v344
        %533 = vset.pattern.permute.xlu0 9
        %534 = vperm.xlu0 %533, %v530
        %v535 = vpop.permute.xlu0 %534
        %538 = vset.pattern.permute.xlu0 9
        %539 = vperm.xlu0 %538, %v531
        %v540 = vpop.permute.xlu0 %539
        %v542 = vmul.f32 %v535, %v525
        %v543 = vmul.f32 %v540, %v527
        %v544 = vadd.f32 %v518, %v542
        %v545 = vadd.f32 %v519, %v543
        %v546 = vadd.f32 %v544, %v545
        %v547 = vrot.slane %v546, 4
        %v548 = vadd.f32 %v546, %v547
        %v549 = vrot.slane %v548, 2
        %v550 = vadd.f32 %v548, %v549
        %v551 = vrot.slane %v550, 1
        %v552 = vadd.f32 %v550, %v551
        %v553 = vadd.f32 %v552, %v449
        %554 = vst [vmem:[%s322 + $0x1] sm:$0x1] %v553
        %555 = vset.pattern.permute.xlu0 2
        %556 = vperm.xlu0 %555, %v340
        %v557 = vpop.permute.xlu0 %556
        %559 = vset.pattern.permute.xlu0 2
        %560 = vperm.xlu0 %559, %v341
        %v561 = vpop.permute.xlu0 %560
        %v563 = vlaneseq
        %v564 = vshrl.u32 %v563, 7
        %v565 = vsub.s32 2, %v564
        %v566 = vrot.slane %v342, %v565
        %v567 = vsub.f32 %v557, %v566
        %v568 = vsub.f32 %v561, %v566
        %v569 = vmul.f32 %v567, %v567
        %v570 = vmul.f32 %v568, %v568
        %s571 = sld [smem:[#allocation3 + $0x2]]
        %v572 = vstv %s571
        %v573 = vmul.f32 %v569, %v572
        %v574 = vmul.f32 %v570, %v572
        %v575 = vmul.f32 %v573, 1.442695
        %v576 = vpow.pop %v575
        %v577 = vmul.f32 %v574, 1.442695
        %v578 = vpow.pop %v577
        %s579 = sld [smem:[#allocation6]]
        %v580 = vstv %s579
        %v581 = vmul.f32 %v580, %v343
        %v582 = vmul.f32 %v580, %v344
        %584 = vset.pattern.permute.xlu0 2
        %585 = vperm.xlu0 %584, %v581
        %v586 = vpop.permute.xlu0 %585
        %589 = vset.pattern.permute.xlu0 2
        %590 = vperm.xlu0 %589, %v582
        %v591 = vpop.permute.xlu0 %590
        %v593 = vmul.f32 %v586, %v576
        %v594 = vmul.f32 %v591, %v578
        %v595 = vadd.f32 %v593, 0.0
        %v596 = vadd.f32 %v594, 0.0
        %s597 = sld [smem:[#allocation3 + $0x82]]
        %v598 = vstv %s597
        %v599 = vmul.f32 %v569, %v598
        %v600 = vmul.f32 %v570, %v598
        %v601 = vmul.f32 %v599, 1.442695
        %v602 = vpow.pop %v601
        %v603 = vmul.f32 %v600, 1.442695
        %v604 = vpow.pop %v603
        %s605 = sld [smem:[#allocation6 + $0x1]]
        %v606 = vstv %s605
        %v607 = vmul.f32 %v606, %v343
        %v608 = vmul.f32 %v606, %v344
        %610 = vset.pattern.permute.xlu0 6
        %611 = vperm.xlu0 %610, %v607
        %v612 = vpop.permute.xlu0 %611
        %615 = vset.pattern.permute.xlu0 6
        %616 = vperm.xlu0 %615, %v608
        %v617 = vpop.permute.xlu0 %616
        %v619 = vmul.f32 %v612, %v602
        %v620 = vmul.f32 %v617, %v604
        %v621 = vadd.f32 %v595, %v619
        %v622 = vadd.f32 %v596, %v620
        %s623 = sld [smem:[#allocation3 + $0x102]]
        %v624 = vstv %s623
        %v625 = vmul.f32 %v569, %v624
        %v626 = vmul.f32 %v570, %v624
        %v627 = vmul.f32 %v625, 1.442695
        %v628 = vpow.pop %v627
        %v629 = vmul.f32 %v626, 1.442695
        %v630 = vpow.pop %v629
        %s631 = sld [smem:[#allocation6 + $0x2]]
        %v632 = vstv %s631
        %v633 = vmul.f32 %v632, %v343
        %v634 = vmul.f32 %v632, %v344
        %636 = vset.pattern.permute.xlu0 10
        %637 = vperm.xlu0 %636, %v633
        %v638 = vpop.permute.xlu0 %637
        %641 = vset.pattern.permute.xlu0 10
        %642 = vperm.xlu0 %641, %v634
        %v643 = vpop.permute.xlu0 %642
        %v645 = vmul.f32 %v638, %v628
        %v646 = vmul.f32 %v643, %v630
        %v647 = vadd.f32 %v621, %v645
        %v648 = vadd.f32 %v622, %v646
        %v649 = vadd.f32 %v647, %v648
        %v650 = vrot.slane %v649, 4
        %v651 = vadd.f32 %v649, %v650
        %v652 = vrot.slane %v651, 2
        %v653 = vadd.f32 %v651, %v652
        %v654 = vrot.slane %v653, 1
        %v655 = vadd.f32 %v653, %v654
        %v656 = vadd.f32 %v655, %v449
        %657 = vst [vmem:[%s322 + $0x2] sm:$0x1] %v656
        %658 = vset.pattern.permute.xlu0 3
        %659 = vperm.xlu0 %658, %v340
        %v660 = vpop.permute.xlu0 %659
        %662 = vset.pattern.permute.xlu0 3
        %663 = vperm.xlu0 %662, %v341
        %v664 = vpop.permute.xlu0 %663
        %v666 = vlaneseq
        %v667 = vshrl.u32 %v666, 7
        %v668 = vsub.s32 3, %v667
        %v669 = vrot.slane %v342, %v668
        %v670 = vsub.f32 %v660, %v669
        %v671 = vsub.f32 %v664, %v669
        %v672 = vmul.f32 %v670, %v670
        %v673 = vmul.f32 %v671, %v671
        %s674 = sld [smem:[#allocation3 + $0x3]]
        %v675 = vstv %s674
        %v676 = vmul.f32 %v672, %v675
        %v677 = vmul.f32 %v673, %v675
        %v678 = vmul.f32 %v676, 1.442695
        %v679 = vpow.pop %v678
        %v680 = vmul.f32 %v677, 1.442695
        %v681 = vpow.pop %v680
        %s682 = sld [smem:[#allocation6]]
        %v683 = vstv %s682
        %v684 = vmul.f32 %v683, %v343
        %v685 = vmul.f32 %v683, %v344
        %687 = vset.pattern.permute.xlu0 3
        %688 = vperm.xlu0 %687, %v684
        %v689 = vpop.permute.xlu0 %688
        %692 = vset.pattern.permute.xlu0 3
        %693 = vperm.xlu0 %692, %v685
        %v694 = vpop.permute.xlu0 %693
        %v696 = vmul.f32 %v689, %v679
        %v697 = vmul.f32 %v694, %v681
        %v698 = vadd.f32 %v696, 0.0
        %v699 = vadd.f32 %v697, 0.0
        %s700 = sld [smem:[#allocation3 + $0x83]]
        %v701 = vstv %s700
        %v702 = vmul.f32 %v672, %v701
        %v703 = vmul.f32 %v673, %v701
        %v704 = vmul.f32 %v702, 1.442695
        %v705 = vpow.pop %v704
        %v706 = vmul.f32 %v703, 1.442695
        %v707 = vpow.pop %v706
        %s708 = sld [smem:[#allocation6 + $0x1]]
        %v709 = vstv %s708
        %v710 = vmul.f32 %v709, %v343
        %v711 = vmul.f32 %v709, %v344
        %713 = vset.pattern.permute.xlu0 7
        %714 = vperm.xlu0 %713, %v710
        %v715 = vpop.permute.xlu0 %714
        %718 = vset.pattern.permute.xlu0 7
        %719 = vperm.xlu0 %718, %v711
        %v720 = vpop.permute.xlu0 %719
        %v722 = vmul.f32 %v715, %v705
        %v723 = vmul.f32 %v720, %v707
        %v724 = vadd.f32 %v698, %v722
        %v725 = vadd.f32 %v699, %v723
        %s726 = sld [smem:[#allocation3 + $0x103]]
        %v727 = vstv %s726
        %v728 = vmul.f32 %v672, %v727
        %v729 = vmul.f32 %v673, %v727
        %v730 = vmul.f32 %v728, 1.442695
        %v731 = vpow.pop %v730
        %v732 = vmul.f32 %v729, 1.442695
        %v733 = vpow.pop %v732
        %s734 = sld [smem:[#allocation6 + $0x2]]
        %v735 = vstv %s734
        %v736 = vmul.f32 %v735, %v343
        %v737 = vmul.f32 %v735, %v344
        %739 = vset.pattern.permute.xlu0 11
        %740 = vperm.xlu0 %739, %v736
        %v741 = vpop.permute.xlu0 %740
        %744 = vset.pattern.permute.xlu0 11
        %745 = vperm.xlu0 %744, %v737
        %v746 = vpop.permute.xlu0 %745
        %v748 = vmul.f32 %v741, %v731
        %v749 = vmul.f32 %v746, %v733
        %v750 = vadd.f32 %v724, %v748
        %v751 = vadd.f32 %v725, %v749
        %v752 = vadd.f32 %v750, %v751
        %v753 = vrot.slane %v752, 4
        %v754 = vadd.f32 %v752, %v753
        %v755 = vrot.slane %v754, 2
        %v756 = vadd.f32 %v754, %v755
        %v757 = vrot.slane %v756, 1
        %v758 = vadd.f32 %v756, %v757
        %v759 = vadd.f32 %v758, %v449
        %760 = vst [vmem:[%s322 + $0x3] sm:$0x1] %v759
        %s761 = sand.u32 %s188, 1
        %s762 = scalar_lea.sflag [#allocation4], %s761
        %s763 = sand.u32 %s188, 1
        %s764 = smul.addr %s763, 4
        %s765 = scalar_lea.vmem [#allocation8], %s764
        // Predicated region
        $region53: #{tpu_custom_call.1} parent=43 // pred_check
          %p766 = pneg %p198
        $region54: #{tpu_custom_call.1} parent=43 // pred_check_branch
          %768 = sbr.rel (%p766) target = $region56
        $region55: #{tpu_custom_call.1} parent=43 // pred_region
          %s770 = ssub.s32 64, 64
          %771 = vsyncadd %s762, %s770
          %s772 = sadd.s32 %s28, %s27
          %s773 = smul.addr %s772, 64
          %s774 = scalar_lea.hbm %s6, %s773
          %s776 = sshll.u32 %s765, 4
          %s777 = int_to_ptr.vmem [resolvable:$true] %s776
          %779 = dma.vmem_to_hbm [thread:$0]  %s777, 64, %s774, %s762
        $region56: #{tpu_custom_call.1} parent=43 // pred_fallthru
          _
      $region44: #{tpu_custom_call.1} parent=5 // pred_fallthru
        _
      %p780 = scmp.le.s32.totalorder 2, %s18
      // Predicated region
      $region57: #{tpu_custom_call.1} parent=5 // pred_check
        %p781 = pneg %p780
      $region58: #{tpu_custom_call.1} parent=5 // pred_check_branch
        %783 = sbr.rel (%p781) target = $region60
      $region59: #{tpu_custom_call.1} parent=5 // pred_region
        %s784 = ssub.s32 %s18, 2
        // Predicated region
        $region61: #{tpu_custom_call.1} parent=59 // pred_check
          %p785 = pneg %p204
        $region62: #{tpu_custom_call.1} parent=59 // pred_check_branch
          %787 = sbr.rel (%p785) target = $region64
        $region63: #{tpu_custom_call.1} parent=59 // pred_region
          %s788 = sand.u32 %s189, 1
          %s789 = scalar_lea.sflag [#allocation4], %s788
          %s790 = sand.u32 %s189, 1
          %s791 = smul.addr %s790, 4
          %s792 = scalar_lea.vmem [#allocation8], %s791
          %793 = dma.done %s789, 64
        $region64: #{tpu_custom_call.1} parent=59 // pred_fallthru
          _
      $region60: #{tpu_custom_call.1} parent=5 // pred_fallthru
        _
    $region6: #{tpu_custom_call.1} parent=1 // loop_footer
      %s22 = sadd.s32 1, %s18
    $region7: #{tpu_custom_call.1} parent=1 // loop_footer_branch
      %17 = sbr.rel target = $region3
    $region8: #{tpu_custom_call.1} parent=1 // loop_exit
      _
    %794 = vsyncpa [#allocation4], 1
    %s795 = scalar_lea.sflag [#allocation4], 1
    %796 = vsyncpa %s795, 1
    %797 = vsyncpa [#allocation5], 1
    %s798 = scalar_lea.sflag [#allocation5], 1
    %799 = vsyncpa %s798, 1
    %800 = vsyncpa [#allocation7], 1

</llo_original>
